<compile_context>
chip_gen: v7x
topology: tpu7x:2x2x1
jax: 0.10.0
libtpu: 0.0.40
codegen_flags: <defaults>
</compile_context>

<pallas_src>
import jax
import jax.numpy as jnp
from jax.experimental import pallas as pl
from jax.experimental.pallas import tpu as pltpu

# ---------------- module hyper-parameters (from __init__) ----------------
N_QUBITS = 4          # n_qubits == c * patch_size**2 (angle embedding)
N_LAYERS = 2
PATCH_SIZE = 2
IMG_SIZE = 16         # img_size_single
NUM_CLASSES = 10
BATCH = 2
CHANNELS = 1          # so c * p * p == n_qubits

LANE = 128            # lane width; P is padded to a multiple of this


# ------------------------------ Pallas kernel -----------------------------
def qnn_kernel(qin_ref, qw_ref, w1_ref, b1_ref, out_ref):
    # qin_ref : (N_QUBITS, P_pad)        VMEM  -- q_in[bs-1]^T, lane-dense in P
    # qw_ref  : (N_QUBITS, N_QUBITS)     SMEM  -- q_params (scalar weights)
    # w1_ref  : (NUM_CLASSES, N_QUBITS)  SMEM  -- fc1 weight
    # b1_ref  : (NUM_CLASSES,)           SMEM  -- fc1 bias
    # out_ref : (NUM_CLASSES, P_pad)     VMEM  -- logits^T

    # One (1, P_pad) lane-dense row per qubit; everything below is VPU/EUP.
    z = [qin_ref[k:k + 1, :] for k in range(N_QUBITS)]

    # Surrogate PQC: n_layers of tanh(z @ q_weights), unrolled K=4 FMAs.
    for _ in range(N_LAYERS):
        new_z = []
        for q in range(N_QUBITS):
            acc = qw_ref[0, q] * z[0]
            for k in range(1, N_QUBITS):
                acc = acc + qw_ref[k, q] * z[k]
            new_z.append(jnp.tanh(acc))
        z = new_z

    # "Expectation values" in [-1, 1].
    expv = [jnp.cos(zq) for zq in z]

    # fc1 head: logits^T[j, :] = b[j] + sum_k w1[j, k] * expv[k]   (VPU FMAs)
    rows = []
    for j in range(NUM_CLASSES):
        acc = b1_ref[j] + w1_ref[j, 0] * expv[0]
        for k in range(1, N_QUBITS):
            acc = acc + w1_ref[j, k] * expv[k]
        rows.append(acc)

    out_ref[...] = jnp.concatenate(rows, axis=0)      # (NUM_CLASSES, P_pad)


# ------------------------------- wrapper -----------------------------------
@jax.jit
def quanv_forward(x, q_params, fc1_w, fc1_b):
    """Forward pass of QuanvolutionalNeuralNetwork.

    x: [bs, c, H, W] float32 (NCHW, as in PyTorch).
    Returns logits of shape [P, num_classes], P = (H-p+1)*(W-p+1).
    Only the last batch element contributes (faithful to the reference bug).
    """
    bs, c, h, w = x.shape
    p = PATCH_SIZE
    ho, wo = h - p + 1, w - p + 1
    P = ho * wo

    # Only the last batch element reaches fc1 in the reference code.
    xe = x[bs - 1]                                          # [c, H, W]

    # im2col via p*p shifted slices; feature order (c, di, dj) matches
    # torch .view(bs, -1, c*p*p); patch order (i, j) row-major matches the
    # original nested loop.  Result is already transposed: [F, P].
    shifts = [xe[:, di:di + ho, dj:dj + wo]
              for di in range(p) for dj in range(p)]        # each [c, ho, wo]
    elem_t = jnp.stack(shifts, axis=1).reshape(c * p * p, P)
    assert elem_t.shape[0] == N_QUBITS

    # Pad P to a lane-dense multiple of 128 (padded columns are sliced off
    # below; do NOT reduce over P before slicing -- cos(0)=1 rows are junk).
    P_pad = ((P + LANE - 1) // LANE) * LANE
    elem_t = jnp.pad(elem_t, ((0, 0), (0, P_pad - P)))

    cost = pl.CostEstimate(
        flops=P_pad * (N_LAYERS * 2 * N_QUBITS * N_QUBITS
                       + 2 * NUM_CLASSES * N_QUBITS + NUM_CLASSES),
        transcendentals=P_pad * N_QUBITS * (N_LAYERS + 1),
        bytes_accessed=4 * (N_QUBITS * P_pad + NUM_CLASSES * P_pad
                            + N_QUBITS * N_QUBITS
                            + NUM_CLASSES * N_QUBITS + NUM_CLASSES),
    )

    out_t = pl.pallas_call(
        qnn_kernel,
        out_shape=jax.ShapeDtypeStruct((NUM_CLASSES, P_pad), jnp.float32),
        in_specs=[
            pl.BlockSpec(memory_space=pltpu.MemorySpace.VMEM),   # patches^T
            pl.BlockSpec(memory_space=pltpu.MemorySpace.SMEM),   # q_params
            pl.BlockSpec(memory_space=pltpu.MemorySpace.SMEM),   # fc1 weight
            pl.BlockSpec(memory_space=pltpu.MemorySpace.SMEM),   # fc1 bias
        ],
        out_specs=pl.BlockSpec(memory_space=pltpu.MemorySpace.VMEM),
        cost_estimate=cost,
    )(elem_t, q_params, fc1_w, fc1_b)

    # Back to the reference orientation [P, num_classes].
    return out_t[:, :P].T


# -------------------- pure-JAX reference (for validation) ------------------
def quanv_reference(x, q_params, fc1_w, fc1_b):
    bs, c, h, w = x.shape
    p = PATCH_SIZE
    patches = []
    for i in range(h - p + 1):
        for j in range(w - p + 1):
            patches.append(x[:, :, i:i + p, j:j + p])
    q_in = jnp.stack(patches, axis=1).reshape(bs, -1, c * p * p)
    z = q_in[bs - 1]                                        # [P, N_QUBITS]
    for _ in range(N_LAYERS):
        z = jnp.tanh(z @ q_params)
    expv = jnp.cos(z)
    return expv @ fc1_w.T + fc1_b


# --------------------------------- main -----------------------------------
if __name__ == "__main__":
    key = jax.random.PRNGKey(0)
    k_x, k_qp, k_w, k_b = jax.random.split(key, 4)

    # deterministic parameter init (shapes from __init__)
    x = jax.random.normal(k_x, (BATCH, CHANNELS, IMG_SIZE, IMG_SIZE),
                          dtype=jnp.float32)
    q_params = 0.001 * jax.random.normal(k_qp, (N_QUBITS, N_QUBITS),
                                         dtype=jnp.float32)
    fc1_w = (1.0 / jnp.sqrt(N_QUBITS)) * jax.random.normal(
        k_w, (NUM_CLASSES, N_QUBITS), dtype=jnp.float32)
    fc1_b = (1.0 / jnp.sqrt(N_QUBITS)) * jax.random.normal(
        k_b, (NUM_CLASSES,), dtype=jnp.float32)

    # Layout sanity check with non-degenerate q_params (0.001*randn makes all
    # expectation values ~cos(0)=1, which would mask transpose/layout bugs).
    q_params_big = 0.5 * jax.random.normal(k_qp, (N_QUBITS, N_QUBITS),
                                           dtype=jnp.float32)
    got = quanv_forward(x, q_params_big, fc1_w, fc1_b)
    want = quanv_reference(x, q_params_big, fc1_w, fc1_b)
    max_err = float(jnp.max(jnp.abs(got - want)))
    assert jnp.allclose(got, want, rtol=1e-3, atol=1e-3), max_err

    # Faithful module init run.
    logits = quanv_forward(x, q_params, fc1_w, fc1_b)
    jax.block_until_ready(logits)

    expected_p = (IMG_SIZE - PATCH_SIZE + 1) ** 2
    assert logits.shape == (expected_p, NUM_CLASSES), logits.shape
    assert jnp.all(jnp.isfinite(logits))
    print("KERNEL_OK")
</pallas_src>

<mosaic_0001>
module attributes {stable_mosaic.version = 11 : i64} {
  func.func @qnn_kernel(%arg0: memref<4x256xf32, #tpu.memory_space<vmem>>, %arg1: memref<4x4xf32, #tpu.memory_space<smem>>, %arg2: memref<10x4xf32, #tpu.memory_space<smem>>, %arg3: memref<10xf32, #tpu.memory_space<smem>>, %arg4: memref<10x256xf32, #tpu.memory_space<vmem>>) attributes {dimension_semantics = [], scalar_prefetch = 0 : i64, scratch_operands = 0 : i64, tpu.core_type = #tpu.core_type<tc>} {
    %c0 = arith.constant 0 : index
    %c0_0 = arith.constant 0 : index
    %0 = vector.load %arg0[%c0, %c0_0] : memref<4x256xf32, #tpu.memory_space<vmem>>, vector<1x256xf32>
    %c1 = arith.constant 1 : index
    %c0_1 = arith.constant 0 : index
    %1 = vector.load %arg0[%c1, %c0_1] : memref<4x256xf32, #tpu.memory_space<vmem>>, vector<1x256xf32>
    %c2 = arith.constant 2 : index
    %c0_2 = arith.constant 0 : index
    %2 = vector.load %arg0[%c2, %c0_2] : memref<4x256xf32, #tpu.memory_space<vmem>>, vector<1x256xf32>
    %c3 = arith.constant 3 : index
    %c0_3 = arith.constant 0 : index
    %3 = vector.load %arg0[%c3, %c0_3] : memref<4x256xf32, #tpu.memory_space<vmem>>, vector<1x256xf32>
    %c0_4 = arith.constant 0 : index
    %c0_5 = arith.constant 0 : index
    %4 = memref.load %arg1[%c0_4, %c0_5] : memref<4x4xf32, #tpu.memory_space<smem>>
    %5 = vector.broadcast %4 : f32 to vector<1x256xf32>
    %6 = arith.mulf %5, %0 : vector<1x256xf32>
    %c1_6 = arith.constant 1 : index
    %c0_7 = arith.constant 0 : index
    %7 = memref.load %arg1[%c1_6, %c0_7] : memref<4x4xf32, #tpu.memory_space<smem>>
    %8 = vector.broadcast %7 : f32 to vector<1x256xf32>
    %9 = arith.mulf %8, %1 : vector<1x256xf32>
    %10 = arith.addf %6, %9 : vector<1x256xf32>
    %c2_8 = arith.constant 2 : index
    %c0_9 = arith.constant 0 : index
    %11 = memref.load %arg1[%c2_8, %c0_9] : memref<4x4xf32, #tpu.memory_space<smem>>
    %12 = vector.broadcast %11 : f32 to vector<1x256xf32>
    %13 = arith.mulf %12, %2 : vector<1x256xf32>
    %14 = arith.addf %10, %13 : vector<1x256xf32>
    %c3_10 = arith.constant 3 : index
    %c0_11 = arith.constant 0 : index
    %15 = memref.load %arg1[%c3_10, %c0_11] : memref<4x4xf32, #tpu.memory_space<smem>>
    %16 = vector.broadcast %15 : f32 to vector<1x256xf32>
    %17 = arith.mulf %16, %3 : vector<1x256xf32>
    %18 = arith.addf %14, %17 : vector<1x256xf32>
    %19 = math.tanh %18 : vector<1x256xf32>
    %c0_12 = arith.constant 0 : index
    %c1_13 = arith.constant 1 : index
    %20 = memref.load %arg1[%c0_12, %c1_13] : memref<4x4xf32, #tpu.memory_space<smem>>
    %21 = vector.broadcast %20 : f32 to vector<1x256xf32>
    %22 = arith.mulf %21, %0 : vector<1x256xf32>
    %c1_14 = arith.constant 1 : index
    %c1_15 = arith.constant 1 : index
    %23 = memref.load %arg1[%c1_14, %c1_15] : memref<4x4xf32, #tpu.memory_space<smem>>
    %24 = vector.broadcast %23 : f32 to vector<1x256xf32>
    %25 = arith.mulf %24, %1 : vector<1x256xf32>
    %26 = arith.addf %22, %25 : vector<1x256xf32>
    %c2_16 = arith.constant 2 : index
    %c1_17 = arith.constant 1 : index
    %27 = memref.load %arg1[%c2_16, %c1_17] : memref<4x4xf32, #tpu.memory_space<smem>>
    %28 = vector.broadcast %27 : f32 to vector<1x256xf32>
    %29 = arith.mulf %28, %2 : vector<1x256xf32>
    %30 = arith.addf %26, %29 : vector<1x256xf32>
    %c3_18 = arith.constant 3 : index
    %c1_19 = arith.constant 1 : index
    %31 = memref.load %arg1[%c3_18, %c1_19] : memref<4x4xf32, #tpu.memory_space<smem>>
    %32 = vector.broadcast %31 : f32 to vector<1x256xf32>
    %33 = arith.mulf %32, %3 : vector<1x256xf32>
    %34 = arith.addf %30, %33 : vector<1x256xf32>
    %35 = math.tanh %34 : vector<1x256xf32>
    %c0_20 = arith.constant 0 : index
    %c2_21 = arith.constant 2 : index
    %36 = memref.load %arg1[%c0_20, %c2_21] : memref<4x4xf32, #tpu.memory_space<smem>>
    %37 = vector.broadcast %36 : f32 to vector<1x256xf32>
    %38 = arith.mulf %37, %0 : vector<1x256xf32>
    %c1_22 = arith.constant 1 : index
    %c2_23 = arith.constant 2 : index
    %39 = memref.load %arg1[%c1_22, %c2_23] : memref<4x4xf32, #tpu.memory_space<smem>>
    %40 = vector.broadcast %39 : f32 to vector<1x256xf32>
    %41 = arith.mulf %40, %1 : vector<1x256xf32>
    %42 = arith.addf %38, %41 : vector<1x256xf32>
    %c2_24 = arith.constant 2 : index
    %c2_25 = arith.constant 2 : index
    %43 = memref.load %arg1[%c2_24, %c2_25] : memref<4x4xf32, #tpu.memory_space<smem>>
    %44 = vector.broadcast %43 : f32 to vector<1x256xf32>
    %45 = arith.mulf %44, %2 : vector<1x256xf32>
    %46 = arith.addf %42, %45 : vector<1x256xf32>
    %c3_26 = arith.constant 3 : index
    %c2_27 = arith.constant 2 : index
    %47 = memref.load %arg1[%c3_26, %c2_27] : memref<4x4xf32, #tpu.memory_space<smem>>
    %48 = vector.broadcast %47 : f32 to vector<1x256xf32>
    %49 = arith.mulf %48, %3 : vector<1x256xf32>
    %50 = arith.addf %46, %49 : vector<1x256xf32>
    %51 = math.tanh %50 : vector<1x256xf32>
    %c0_28 = arith.constant 0 : index
    %c3_29 = arith.constant 3 : index
    %52 = memref.load %arg1[%c0_28, %c3_29] : memref<4x4xf32, #tpu.memory_space<smem>>
    %53 = vector.broadcast %52 : f32 to vector<1x256xf32>
    %54 = arith.mulf %53, %0 : vector<1x256xf32>
    %c1_30 = arith.constant 1 : index
    %c3_31 = arith.constant 3 : index
    %55 = memref.load %arg1[%c1_30, %c3_31] : memref<4x4xf32, #tpu.memory_space<smem>>
    %56 = vector.broadcast %55 : f32 to vector<1x256xf32>
    %57 = arith.mulf %56, %1 : vector<1x256xf32>
    %58 = arith.addf %54, %57 : vector<1x256xf32>
    %c2_32 = arith.constant 2 : index
    %c3_33 = arith.constant 3 : index
    %59 = memref.load %arg1[%c2_32, %c3_33] : memref<4x4xf32, #tpu.memory_space<smem>>
    %60 = vector.broadcast %59 : f32 to vector<1x256xf32>
    %61 = arith.mulf %60, %2 : vector<1x256xf32>
    %62 = arith.addf %58, %61 : vector<1x256xf32>
    %c3_34 = arith.constant 3 : index
    %c3_35 = arith.constant 3 : index
    %63 = memref.load %arg1[%c3_34, %c3_35] : memref<4x4xf32, #tpu.memory_space<smem>>
    %64 = vector.broadcast %63 : f32 to vector<1x256xf32>
    %65 = arith.mulf %64, %3 : vector<1x256xf32>
    %66 = arith.addf %62, %65 : vector<1x256xf32>
    %67 = math.tanh %66 : vector<1x256xf32>
    %c0_36 = arith.constant 0 : index
    %c0_37 = arith.constant 0 : index
    %68 = memref.load %arg1[%c0_36, %c0_37] : memref<4x4xf32, #tpu.memory_space<smem>>
    %69 = vector.broadcast %68 : f32 to vector<1x256xf32>
    %70 = arith.mulf %69, %19 : vector<1x256xf32>
    %c1_38 = arith.constant 1 : index
    %c0_39 = arith.constant 0 : index
    %71 = memref.load %arg1[%c1_38, %c0_39] : memref<4x4xf32, #tpu.memory_space<smem>>
    %72 = vector.broadcast %71 : f32 to vector<1x256xf32>
    %73 = arith.mulf %72, %35 : vector<1x256xf32>
    %74 = arith.addf %70, %73 : vector<1x256xf32>
    %c2_40 = arith.constant 2 : index
    %c0_41 = arith.constant 0 : index
    %75 = memref.load %arg1[%c2_40, %c0_41] : memref<4x4xf32, #tpu.memory_space<smem>>
    %76 = vector.broadcast %75 : f32 to vector<1x256xf32>
    %77 = arith.mulf %76, %51 : vector<1x256xf32>
    %78 = arith.addf %74, %77 : vector<1x256xf32>
    %c3_42 = arith.constant 3 : index
    %c0_43 = arith.constant 0 : index
    %79 = memref.load %arg1[%c3_42, %c0_43] : memref<4x4xf32, #tpu.memory_space<smem>>
    %80 = vector.broadcast %79 : f32 to vector<1x256xf32>
    %81 = arith.mulf %80, %67 : vector<1x256xf32>
    %82 = arith.addf %78, %81 : vector<1x256xf32>
    %83 = math.tanh %82 : vector<1x256xf32>
    %c0_44 = arith.constant 0 : index
    %c1_45 = arith.constant 1 : index
    %84 = memref.load %arg1[%c0_44, %c1_45] : memref<4x4xf32, #tpu.memory_space<smem>>
    %85 = vector.broadcast %84 : f32 to vector<1x256xf32>
    %86 = arith.mulf %85, %19 : vector<1x256xf32>
    %c1_46 = arith.constant 1 : index
    %c1_47 = arith.constant 1 : index
    %87 = memref.load %arg1[%c1_46, %c1_47] : memref<4x4xf32, #tpu.memory_space<smem>>
    %88 = vector.broadcast %87 : f32 to vector<1x256xf32>
    %89 = arith.mulf %88, %35 : vector<1x256xf32>
    %90 = arith.addf %86, %89 : vector<1x256xf32>
    %c2_48 = arith.constant 2 : index
    %c1_49 = arith.constant 1 : index
    %91 = memref.load %arg1[%c2_48, %c1_49] : memref<4x4xf32, #tpu.memory_space<smem>>
    %92 = vector.broadcast %91 : f32 to vector<1x256xf32>
    %93 = arith.mulf %92, %51 : vector<1x256xf32>
    %94 = arith.addf %90, %93 : vector<1x256xf32>
    %c3_50 = arith.constant 3 : index
    %c1_51 = arith.constant 1 : index
    %95 = memref.load %arg1[%c3_50, %c1_51] : memref<4x4xf32, #tpu.memory_space<smem>>
    %96 = vector.broadcast %95 : f32 to vector<1x256xf32>
    %97 = arith.mulf %96, %67 : vector<1x256xf32>
    %98 = arith.addf %94, %97 : vector<1x256xf32>
    %99 = math.tanh %98 : vector<1x256xf32>
    %c0_52 = arith.constant 0 : index
    %c2_53 = arith.constant 2 : index
    %100 = memref.load %arg1[%c0_52, %c2_53] : memref<4x4xf32, #tpu.memory_space<smem>>
    %101 = vector.broadcast %100 : f32 to vector<1x256xf32>
    %102 = arith.mulf %101, %19 : vector<1x256xf32>
    %c1_54 = arith.constant 1 : index
    %c2_55 = arith.constant 2 : index
    %103 = memref.load %arg1[%c1_54, %c2_55] : memref<4x4xf32, #tpu.memory_space<smem>>
    %104 = vector.broadcast %103 : f32 to vector<1x256xf32>
    %105 = arith.mulf %104, %35 : vector<1x256xf32>
    %106 = arith.addf %102, %105 : vector<1x256xf32>
    %c2_56 = arith.constant 2 : index
    %c2_57 = arith.constant 2 : index
    %107 = memref.load %arg1[%c2_56, %c2_57] : memref<4x4xf32, #tpu.memory_space<smem>>
    %108 = vector.broadcast %107 : f32 to vector<1x256xf32>
    %109 = arith.mulf %108, %51 : vector<1x256xf32>
    %110 = arith.addf %106, %109 : vector<1x256xf32>
    %c3_58 = arith.constant 3 : index
    %c2_59 = arith.constant 2 : index
    %111 = memref.load %arg1[%c3_58, %c2_59] : memref<4x4xf32, #tpu.memory_space<smem>>
    %112 = vector.broadcast %111 : f32 to vector<1x256xf32>
    %113 = arith.mulf %112, %67 : vector<1x256xf32>
    %114 = arith.addf %110, %113 : vector<1x256xf32>
    %115 = math.tanh %114 : vector<1x256xf32>
    %c0_60 = arith.constant 0 : index
    %c3_61 = arith.constant 3 : index
    %116 = memref.load %arg1[%c0_60, %c3_61] : memref<4x4xf32, #tpu.memory_space<smem>>
    %117 = vector.broadcast %116 : f32 to vector<1x256xf32>
    %118 = arith.mulf %117, %19 : vector<1x256xf32>
    %c1_62 = arith.constant 1 : index
    %c3_63 = arith.constant 3 : index
    %119 = memref.load %arg1[%c1_62, %c3_63] : memref<4x4xf32, #tpu.memory_space<smem>>
    %120 = vector.broadcast %119 : f32 to vector<1x256xf32>
    %121 = arith.mulf %120, %35 : vector<1x256xf32>
    %122 = arith.addf %118, %121 : vector<1x256xf32>
    %c2_64 = arith.constant 2 : index
    %c3_65 = arith.constant 3 : index
    %123 = memref.load %arg1[%c2_64, %c3_65] : memref<4x4xf32, #tpu.memory_space<smem>>
    %124 = vector.broadcast %123 : f32 to vector<1x256xf32>
    %125 = arith.mulf %124, %51 : vector<1x256xf32>
    %126 = arith.addf %122, %125 : vector<1x256xf32>
    %c3_66 = arith.constant 3 : index
    %c3_67 = arith.constant 3 : index
    %127 = memref.load %arg1[%c3_66, %c3_67] : memref<4x4xf32, #tpu.memory_space<smem>>
    %128 = vector.broadcast %127 : f32 to vector<1x256xf32>
    %129 = arith.mulf %128, %67 : vector<1x256xf32>
    %130 = arith.addf %126, %129 : vector<1x256xf32>
    %131 = math.tanh %130 : vector<1x256xf32>
    %132 = math.cos %83 : vector<1x256xf32>
    %133 = math.cos %99 : vector<1x256xf32>
    %134 = math.cos %115 : vector<1x256xf32>
    %135 = math.cos %131 : vector<1x256xf32>
    %c0_68 = arith.constant 0 : index
    %136 = memref.load %arg3[%c0_68] : memref<10xf32, #tpu.memory_space<smem>>
    %c0_69 = arith.constant 0 : index
    %c0_70 = arith.constant 0 : index
    %137 = memref.load %arg2[%c0_69, %c0_70] : memref<10x4xf32, #tpu.memory_space<smem>>
    %138 = vector.broadcast %137 : f32 to vector<1x256xf32>
    %139 = arith.mulf %138, %132 : vector<1x256xf32>
    %140 = vector.broadcast %136 : f32 to vector<1x256xf32>
    %141 = arith.addf %140, %139 : vector<1x256xf32>
    %c0_71 = arith.constant 0 : index
    %c1_72 = arith.constant 1 : index
    %142 = memref.load %arg2[%c0_71, %c1_72] : memref<10x4xf32, #tpu.memory_space<smem>>
    %143 = vector.broadcast %142 : f32 to vector<1x256xf32>
    %144 = arith.mulf %143, %133 : vector<1x256xf32>
    %145 = arith.addf %141, %144 : vector<1x256xf32>
    %c0_73 = arith.constant 0 : index
    %c2_74 = arith.constant 2 : index
    %146 = memref.load %arg2[%c0_73, %c2_74] : memref<10x4xf32, #tpu.memory_space<smem>>
    %147 = vector.broadcast %146 : f32 to vector<1x256xf32>
    %148 = arith.mulf %147, %134 : vector<1x256xf32>
    %149 = arith.addf %145, %148 : vector<1x256xf32>
    %c0_75 = arith.constant 0 : index
    %c3_76 = arith.constant 3 : index
    %150 = memref.load %arg2[%c0_75, %c3_76] : memref<10x4xf32, #tpu.memory_space<smem>>
    %151 = vector.broadcast %150 : f32 to vector<1x256xf32>
    %152 = arith.mulf %151, %135 : vector<1x256xf32>
    %153 = arith.addf %149, %152 : vector<1x256xf32>
    %c1_77 = arith.constant 1 : index
    %154 = memref.load %arg3[%c1_77] : memref<10xf32, #tpu.memory_space<smem>>
    %c1_78 = arith.constant 1 : index
    %c0_79 = arith.constant 0 : index
    %155 = memref.load %arg2[%c1_78, %c0_79] : memref<10x4xf32, #tpu.memory_space<smem>>
    %156 = vector.broadcast %155 : f32 to vector<1x256xf32>
    %157 = arith.mulf %156, %132 : vector<1x256xf32>
    %158 = vector.broadcast %154 : f32 to vector<1x256xf32>
    %159 = arith.addf %158, %157 : vector<1x256xf32>
    %c1_80 = arith.constant 1 : index
    %c1_81 = arith.constant 1 : index
    %160 = memref.load %arg2[%c1_80, %c1_81] : memref<10x4xf32, #tpu.memory_space<smem>>
    %161 = vector.broadcast %160 : f32 to vector<1x256xf32>
    %162 = arith.mulf %161, %133 : vector<1x256xf32>
    %163 = arith.addf %159, %162 : vector<1x256xf32>
    %c1_82 = arith.constant 1 : index
    %c2_83 = arith.constant 2 : index
    %164 = memref.load %arg2[%c1_82, %c2_83] : memref<10x4xf32, #tpu.memory_space<smem>>
    %165 = vector.broadcast %164 : f32 to vector<1x256xf32>
    %166 = arith.mulf %165, %134 : vector<1x256xf32>
    %167 = arith.addf %163, %166 : vector<1x256xf32>
    %c1_84 = arith.constant 1 : index
    %c3_85 = arith.constant 3 : index
    %168 = memref.load %arg2[%c1_84, %c3_85] : memref<10x4xf32, #tpu.memory_space<smem>>
    %169 = vector.broadcast %168 : f32 to vector<1x256xf32>
    %170 = arith.mulf %169, %135 : vector<1x256xf32>
    %171 = arith.addf %167, %170 : vector<1x256xf32>
    %c2_86 = arith.constant 2 : index
    %172 = memref.load %arg3[%c2_86] : memref<10xf32, #tpu.memory_space<smem>>
    %c2_87 = arith.constant 2 : index
    %c0_88 = arith.constant 0 : index
    %173 = memref.load %arg2[%c2_87, %c0_88] : memref<10x4xf32, #tpu.memory_space<smem>>
    %174 = vector.broadcast %173 : f32 to vector<1x256xf32>
    %175 = arith.mulf %174, %132 : vector<1x256xf32>
    %176 = vector.broadcast %172 : f32 to vector<1x256xf32>
    %177 = arith.addf %176, %175 : vector<1x256xf32>
    %c2_89 = arith.constant 2 : index
    %c1_90 = arith.constant 1 : index
    %178 = memref.load %arg2[%c2_89, %c1_90] : memref<10x4xf32, #tpu.memory_space<smem>>
    %179 = vector.broadcast %178 : f32 to vector<1x256xf32>
    %180 = arith.mulf %179, %133 : vector<1x256xf32>
    %181 = arith.addf %177, %180 : vector<1x256xf32>
    %c2_91 = arith.constant 2 : index
    %c2_92 = arith.constant 2 : index
    %182 = memref.load %arg2[%c2_91, %c2_92] : memref<10x4xf32, #tpu.memory_space<smem>>
    %183 = vector.broadcast %182 : f32 to vector<1x256xf32>
    %184 = arith.mulf %183, %134 : vector<1x256xf32>
    %185 = arith.addf %181, %184 : vector<1x256xf32>
    %c2_93 = arith.constant 2 : index
    %c3_94 = arith.constant 3 : index
    %186 = memref.load %arg2[%c2_93, %c3_94] : memref<10x4xf32, #tpu.memory_space<smem>>
    %187 = vector.broadcast %186 : f32 to vector<1x256xf32>
    %188 = arith.mulf %187, %135 : vector<1x256xf32>
    %189 = arith.addf %185, %188 : vector<1x256xf32>
    %c3_95 = arith.constant 3 : index
    %190 = memref.load %arg3[%c3_95] : memref<10xf32, #tpu.memory_space<smem>>
    %c3_96 = arith.constant 3 : index
    %c0_97 = arith.constant 0 : index
    %191 = memref.load %arg2[%c3_96, %c0_97] : memref<10x4xf32, #tpu.memory_space<smem>>
    %192 = vector.broadcast %191 : f32 to vector<1x256xf32>
    %193 = arith.mulf %192, %132 : vector<1x256xf32>
    %194 = vector.broadcast %190 : f32 to vector<1x256xf32>
    %195 = arith.addf %194, %193 : vector<1x256xf32>
    %c3_98 = arith.constant 3 : index
    %c1_99 = arith.constant 1 : index
    %196 = memref.load %arg2[%c3_98, %c1_99] : memref<10x4xf32, #tpu.memory_space<smem>>
    %197 = vector.broadcast %196 : f32 to vector<1x256xf32>
    %198 = arith.mulf %197, %133 : vector<1x256xf32>
    %199 = arith.addf %195, %198 : vector<1x256xf32>
    %c3_100 = arith.constant 3 : index
    %c2_101 = arith.constant 2 : index
    %200 = memref.load %arg2[%c3_100, %c2_101] : memref<10x4xf32, #tpu.memory_space<smem>>
    %201 = vector.broadcast %200 : f32 to vector<1x256xf32>
    %202 = arith.mulf %201, %134 : vector<1x256xf32>
    %203 = arith.addf %199, %202 : vector<1x256xf32>
    %c3_102 = arith.constant 3 : index
    %c3_103 = arith.constant 3 : index
    %204 = memref.load %arg2[%c3_102, %c3_103] : memref<10x4xf32, #tpu.memory_space<smem>>
    %205 = vector.broadcast %204 : f32 to vector<1x256xf32>
    %206 = arith.mulf %205, %135 : vector<1x256xf32>
    %207 = arith.addf %203, %206 : vector<1x256xf32>
    %c4 = arith.constant 4 : index
    %208 = memref.load %arg3[%c4] : memref<10xf32, #tpu.memory_space<smem>>
    %c4_104 = arith.constant 4 : index
    %c0_105 = arith.constant 0 : index
    %209 = memref.load %arg2[%c4_104, %c0_105] : memref<10x4xf32, #tpu.memory_space<smem>>
    %210 = vector.broadcast %209 : f32 to vector<1x256xf32>
    %211 = arith.mulf %210, %132 : vector<1x256xf32>
    %212 = vector.broadcast %208 : f32 to vector<1x256xf32>
    %213 = arith.addf %212, %211 : vector<1x256xf32>
    %c4_106 = arith.constant 4 : index
    %c1_107 = arith.constant 1 : index
    %214 = memref.load %arg2[%c4_106, %c1_107] : memref<10x4xf32, #tpu.memory_space<smem>>
    %215 = vector.broadcast %214 : f32 to vector<1x256xf32>
    %216 = arith.mulf %215, %133 : vector<1x256xf32>
    %217 = arith.addf %213, %216 : vector<1x256xf32>
    %c4_108 = arith.constant 4 : index
    %c2_109 = arith.constant 2 : index
    %218 = memref.load %arg2[%c4_108, %c2_109] : memref<10x4xf32, #tpu.memory_space<smem>>
    %219 = vector.broadcast %218 : f32 to vector<1x256xf32>
    %220 = arith.mulf %219, %134 : vector<1x256xf32>
    %221 = arith.addf %217, %220 : vector<1x256xf32>
    %c4_110 = arith.constant 4 : index
    %c3_111 = arith.constant 3 : index
    %222 = memref.load %arg2[%c4_110, %c3_111] : memref<10x4xf32, #tpu.memory_space<smem>>
    %223 = vector.broadcast %222 : f32 to vector<1x256xf32>
    %224 = arith.mulf %223, %135 : vector<1x256xf32>
    %225 = arith.addf %221, %224 : vector<1x256xf32>
    %c5 = arith.constant 5 : index
    %226 = memref.load %arg3[%c5] : memref<10xf32, #tpu.memory_space<smem>>
    %c5_112 = arith.constant 5 : index
    %c0_113 = arith.constant 0 : index
    %227 = memref.load %arg2[%c5_112, %c0_113] : memref<10x4xf32, #tpu.memory_space<smem>>
    %228 = vector.broadcast %227 : f32 to vector<1x256xf32>
    %229 = arith.mulf %228, %132 : vector<1x256xf32>
    %230 = vector.broadcast %226 : f32 to vector<1x256xf32>
    %231 = arith.addf %230, %229 : vector<1x256xf32>
    %c5_114 = arith.constant 5 : index
    %c1_115 = arith.constant 1 : index
    %232 = memref.load %arg2[%c5_114, %c1_115] : memref<10x4xf32, #tpu.memory_space<smem>>
    %233 = vector.broadcast %232 : f32 to vector<1x256xf32>
    %234 = arith.mulf %233, %133 : vector<1x256xf32>
    %235 = arith.addf %231, %234 : vector<1x256xf32>
    %c5_116 = arith.constant 5 : index
    %c2_117 = arith.constant 2 : index
    %236 = memref.load %arg2[%c5_116, %c2_117] : memref<10x4xf32, #tpu.memory_space<smem>>
    %237 = vector.broadcast %236 : f32 to vector<1x256xf32>
    %238 = arith.mulf %237, %134 : vector<1x256xf32>
    %239 = arith.addf %235, %238 : vector<1x256xf32>
    %c5_118 = arith.constant 5 : index
    %c3_119 = arith.constant 3 : index
    %240 = memref.load %arg2[%c5_118, %c3_119] : memref<10x4xf32, #tpu.memory_space<smem>>
    %241 = vector.broadcast %240 : f32 to vector<1x256xf32>
    %242 = arith.mulf %241, %135 : vector<1x256xf32>
    %243 = arith.addf %239, %242 : vector<1x256xf32>
    %c6 = arith.constant 6 : index
    %244 = memref.load %arg3[%c6] : memref<10xf32, #tpu.memory_space<smem>>
    %c6_120 = arith.constant 6 : index
    %c0_121 = arith.constant 0 : index
    %245 = memref.load %arg2[%c6_120, %c0_121] : memref<10x4xf32, #tpu.memory_space<smem>>
    %246 = vector.broadcast %245 : f32 to vector<1x256xf32>
    %247 = arith.mulf %246, %132 : vector<1x256xf32>
    %248 = vector.broadcast %244 : f32 to vector<1x256xf32>
    %249 = arith.addf %248, %247 : vector<1x256xf32>
    %c6_122 = arith.constant 6 : index
    %c1_123 = arith.constant 1 : index
    %250 = memref.load %arg2[%c6_122, %c1_123] : memref<10x4xf32, #tpu.memory_space<smem>>
    %251 = vector.broadcast %250 : f32 to vector<1x256xf32>
    %252 = arith.mulf %251, %133 : vector<1x256xf32>
    %253 = arith.addf %249, %252 : vector<1x256xf32>
    %c6_124 = arith.constant 6 : index
    %c2_125 = arith.constant 2 : index
    %254 = memref.load %arg2[%c6_124, %c2_125] : memref<10x4xf32, #tpu.memory_space<smem>>
    %255 = vector.broadcast %254 : f32 to vector<1x256xf32>
    %256 = arith.mulf %255, %134 : vector<1x256xf32>
    %257 = arith.addf %253, %256 : vector<1x256xf32>
    %c6_126 = arith.constant 6 : index
    %c3_127 = arith.constant 3 : index
    %258 = memref.load %arg2[%c6_126, %c3_127] : memref<10x4xf32, #tpu.memory_space<smem>>
    %259 = vector.broadcast %258 : f32 to vector<1x256xf32>
    %260 = arith.mulf %259, %135 : vector<1x256xf32>
    %261 = arith.addf %257, %260 : vector<1x256xf32>
    %c7 = arith.constant 7 : index
    %262 = memref.load %arg3[%c7] : memref<10xf32, #tpu.memory_space<smem>>
    %c7_128 = arith.constant 7 : index
    %c0_129 = arith.constant 0 : index
    %263 = memref.load %arg2[%c7_128, %c0_129] : memref<10x4xf32, #tpu.memory_space<smem>>
    %264 = vector.broadcast %263 : f32 to vector<1x256xf32>
    %265 = arith.mulf %264, %132 : vector<1x256xf32>
    %266 = vector.broadcast %262 : f32 to vector<1x256xf32>
    %267 = arith.addf %266, %265 : vector<1x256xf32>
    %c7_130 = arith.constant 7 : index
    %c1_131 = arith.constant 1 : index
    %268 = memref.load %arg2[%c7_130, %c1_131] : memref<10x4xf32, #tpu.memory_space<smem>>
    %269 = vector.broadcast %268 : f32 to vector<1x256xf32>
    %270 = arith.mulf %269, %133 : vector<1x256xf32>
    %271 = arith.addf %267, %270 : vector<1x256xf32>
    %c7_132 = arith.constant 7 : index
    %c2_133 = arith.constant 2 : index
    %272 = memref.load %arg2[%c7_132, %c2_133] : memref<10x4xf32, #tpu.memory_space<smem>>
    %273 = vector.broadcast %272 : f32 to vector<1x256xf32>
    %274 = arith.mulf %273, %134 : vector<1x256xf32>
    %275 = arith.addf %271, %274 : vector<1x256xf32>
    %c7_134 = arith.constant 7 : index
    %c3_135 = arith.constant 3 : index
    %276 = memref.load %arg2[%c7_134, %c3_135] : memref<10x4xf32, #tpu.memory_space<smem>>
    %277 = vector.broadcast %276 : f32 to vector<1x256xf32>
    %278 = arith.mulf %277, %135 : vector<1x256xf32>
    %279 = arith.addf %275, %278 : vector<1x256xf32>
    %c8 = arith.constant 8 : index
    %280 = memref.load %arg3[%c8] : memref<10xf32, #tpu.memory_space<smem>>
    %c8_136 = arith.constant 8 : index
    %c0_137 = arith.constant 0 : index
    %281 = memref.load %arg2[%c8_136, %c0_137] : memref<10x4xf32, #tpu.memory_space<smem>>
    %282 = vector.broadcast %281 : f32 to vector<1x256xf32>
    %283 = arith.mulf %282, %132 : vector<1x256xf32>
    %284 = vector.broadcast %280 : f32 to vector<1x256xf32>
    %285 = arith.addf %284, %283 : vector<1x256xf32>
    %c8_138 = arith.constant 8 : index
    %c1_139 = arith.constant 1 : index
    %286 = memref.load %arg2[%c8_138, %c1_139] : memref<10x4xf32, #tpu.memory_space<smem>>
    %287 = vector.broadcast %286 : f32 to vector<1x256xf32>
    %288 = arith.mulf %287, %133 : vector<1x256xf32>
    %289 = arith.addf %285, %288 : vector<1x256xf32>
    %c8_140 = arith.constant 8 : index
    %c2_141 = arith.constant 2 : index
    %290 = memref.load %arg2[%c8_140, %c2_141] : memref<10x4xf32, #tpu.memory_space<smem>>
    %291 = vector.broadcast %290 : f32 to vector<1x256xf32>
    %292 = arith.mulf %291, %134 : vector<1x256xf32>
    %293 = arith.addf %289, %292 : vector<1x256xf32>
    %c8_142 = arith.constant 8 : index
    %c3_143 = arith.constant 3 : index
    %294 = memref.load %arg2[%c8_142, %c3_143] : memref<10x4xf32, #tpu.memory_space<smem>>
    %295 = vector.broadcast %294 : f32 to vector<1x256xf32>
    %296 = arith.mulf %295, %135 : vector<1x256xf32>
    %297 = arith.addf %293, %296 : vector<1x256xf32>
    %c9 = arith.constant 9 : index
    %298 = memref.load %arg3[%c9] : memref<10xf32, #tpu.memory_space<smem>>
    %c9_144 = arith.constant 9 : index
    %c0_145 = arith.constant 0 : index
    %299 = memref.load %arg2[%c9_144, %c0_145] : memref<10x4xf32, #tpu.memory_space<smem>>
    %300 = vector.broadcast %299 : f32 to vector<1x256xf32>
    %301 = arith.mulf %300, %132 : vector<1x256xf32>
    %302 = vector.broadcast %298 : f32 to vector<1x256xf32>
    %303 = arith.addf %302, %301 : vector<1x256xf32>
    %c9_146 = arith.constant 9 : index
    %c1_147 = arith.constant 1 : index
    %304 = memref.load %arg2[%c9_146, %c1_147] : memref<10x4xf32, #tpu.memory_space<smem>>
    %305 = vector.broadcast %304 : f32 to vector<1x256xf32>
    %306 = arith.mulf %305, %133 : vector<1x256xf32>
    %307 = arith.addf %303, %306 : vector<1x256xf32>
    %c9_148 = arith.constant 9 : index
    %c2_149 = arith.constant 2 : index
    %308 = memref.load %arg2[%c9_148, %c2_149] : memref<10x4xf32, #tpu.memory_space<smem>>
    %309 = vector.broadcast %308 : f32 to vector<1x256xf32>
    %310 = arith.mulf %309, %134 : vector<1x256xf32>
    %311 = arith.addf %307, %310 : vector<1x256xf32>
    %c9_150 = arith.constant 9 : index
    %c3_151 = arith.constant 3 : index
    %312 = memref.load %arg2[%c9_150, %c3_151] : memref<10x4xf32, #tpu.memory_space<smem>>
    %313 = vector.broadcast %312 : f32 to vector<1x256xf32>
    %314 = arith.mulf %313, %135 : vector<1x256xf32>
    %315 = arith.addf %311, %314 : vector<1x256xf32>
    %316 = tpu.concatenate %153, %171, %189, %207, %225, %243, %261, %279, %297, %315 in 0 : vector<1x256xf32>, vector<1x256xf32>, vector<1x256xf32>, vector<1x256xf32>, vector<1x256xf32>, vector<1x256xf32>, vector<1x256xf32>, vector<1x256xf32>, vector<1x256xf32>, vector<1x256xf32> -> vector<10x256xf32>
    %c0_152 = arith.constant 0 : index
    %c0_153 = arith.constant 0 : index
    %317 = vector.load %arg4[%c0_152, %c0_153] : memref<10x256xf32, #tpu.memory_space<vmem>>, vector<10x256xf32>
    tpu.vector_store %arg4[%c0_152, %c0_153], %316 {strides = array<i32>} : memref<10x256xf32, #tpu.memory_space<vmem>>, vector<10x256xf32>,
    return
  }
}

</mosaic_0001>

<llo_original>
// kernel: quanv_forward.1
$region0: #{quanv_forward.1}
  #allocation0 [shape = 'u32[]', space=smem, size = 0x4, offset = 0x4, fixed_abs, tag = 'smem constant byte address 0x4 - core index']
  #allocation1 [shape = 'u32[144,128]{1,0:T(1,128)}', space=vmem, size = 0x12000, scoped, tag = 'internal scratch']
  %s0 = inlined_call_operand.vmem [shape: f32[4,256], index: 0, kind: input, shape index: {}]
  %s1 = inlined_call_operand.vmem [shape: f32[4,4], index: 1, kind: input, shape index: {}]
  %s2 = inlined_call_operand.vmem [shape: f32[10,4], index: 2, kind: input, shape index: {}]
  %s3 = inlined_call_operand.vmem [shape: f32[10], index: 3, kind: input, shape index: {}]
  %s4 = inlined_call_operand.vmem [shape: f32[10,256], index: 4, kind: output, shape index: {}]
  %s5 = sld [smem:[#allocation0]]
  $region38: #{quanv_forward.1} parent=0
    _
  %s7 = ssub.s32 1, %s5
  %s8 = scalar_select 0, %s7, %s5
  $region1: #{quanv_forward.1} parent=0
    #allocation2 [shape = 'u8[2048]{0}', space=smem, size = 0x800, scoped, tag = 'input window, operand 1, single buffered']
    #allocation3 [shape = 's32[1]{0}', space=sflag, size = 0x4, scoped, tag = 'scoped memory for quanv_forward.1']
    #allocation4 [shape = 'u8[8192]{0}', space=smem, size = 0x2000, scoped, tag = 'input window, operand 2, single buffered']
    #allocation5 [shape = 's32[1]{0}', space=sflag, size = 0x4, scoped, tag = 'scoped memory for quanv_forward.1']
    #allocation6 [shape = 'u8[512]{0}', space=smem, size = 0x200, scoped, tag = 'input window, operand 3, single buffered']
    %9 = vsyncpa [#allocation3], 0
    %10 = vsyncpa [#allocation5], 0
    // Predicated region
    $region2: #{quanv_forward.1} parent=1 // pred_check
      _
    $region3: #{quanv_forward.1} parent=1 // pred_check_branch
      %12 = sbr.rel (0) target = $region5
    $region4: #{quanv_forward.1} parent=1 // pred_region
      _
    $region5: #{quanv_forward.1} parent=1 // pred_fallthru
      _
    // Predicated region
    $region6: #{quanv_forward.1} parent=1 // pred_check
      _
    $region7: #{quanv_forward.1} parent=1 // pred_check_branch
      %14 = sbr.rel (0) target = $region9
    $region8: #{quanv_forward.1} parent=1 // pred_region
      %s16 = ssub.s32 64, 64
      %17 = vsyncadd [#allocation3], %s16
      %s19 = sshll.u32 %s1, 4
      %s20 = int_to_ptr.vmem [resolvable:$true] %s19
      %22 = dma.vmem_to_smem %s20, 64, [#allocation2], [#allocation3]
    $region9: #{quanv_forward.1} parent=1 // pred_fallthru
      _
    // Predicated region
    $region10: #{quanv_forward.1} parent=1 // pred_check
      _
    $region11: #{quanv_forward.1} parent=1 // pred_check_branch
      %24 = sbr.rel (0) target = $region13
    $region12: #{quanv_forward.1} parent=1 // pred_region
      %s26 = ssub.s32 256, 256
      %27 = vsyncadd [#allocation5], %s26
      %s28 = sshll.u32 %s2, 4
      %s29 = int_to_ptr.vmem [resolvable:$true] %s28
      %34 = dma.vmem_to_smem %s29, 256, [#allocation4], [#allocation5], 128, 128, 8
    $region13: #{quanv_forward.1} parent=1 // pred_fallthru
      _
    // Predicated region
    $region14: #{quanv_forward.1} parent=1 // pred_check
      _
    $region15: #{quanv_forward.1} parent=1 // pred_check_branch
      %36 = sbr.rel (0) target = $region17
    $region16: #{quanv_forward.1} parent=1 // pred_region
      %s38 = ssub.s32 16, 16
      %39 = vsyncadd [#allocation5], %s38
      %s41 = sshll.u32 %s3, 4
      %s42 = int_to_ptr.vmem [resolvable:$true] %s41
      %44 = dma.vmem_to_smem %s42, 16, [#allocation6], [#allocation5]
    $region17: #{quanv_forward.1} parent=1 // pred_fallthru
      _
    // Predicated region
    $region18: #{quanv_forward.1} parent=1 // pred_check
      _
    $region19: #{quanv_forward.1} parent=1 // pred_check_branch
      %46 = sbr.rel (0) target = $region21
    $region20: #{quanv_forward.1} parent=1 // pred_region
      %47 = dma.done [#allocation3], 64
    $region21: #{quanv_forward.1} parent=1 // pred_fallthru
      _
    // Predicated region
    $region22: #{quanv_forward.1} parent=1 // pred_check
      _
    $region23: #{quanv_forward.1} parent=1 // pred_check_branch
      %49 = sbr.rel (0) target = $region25
    $region24: #{quanv_forward.1} parent=1 // pred_region
      %50 = dma.done [#allocation5], 256
    $region25: #{quanv_forward.1} parent=1 // pred_fallthru
      _
    // Predicated region
    $region26: #{quanv_forward.1} parent=1 // pred_check
      _
    $region27: #{quanv_forward.1} parent=1 // pred_check_branch
      %52 = sbr.rel (0) target = $region29
    $region28: #{quanv_forward.1} parent=1 // pred_region
      %53 = dma.done [#allocation5], 16
    $region29: #{quanv_forward.1} parent=1 // pred_fallthru
      _
    %54 = sfence
    %v55 = vld [vmem:[%s0] ss:$4 sm:$0x3]
    %s56 = scalar_lea.vmem %s0, 1
    %v57 = vld [vmem:[%s56] ss:$4 sm:$0x3]
    %s58 = scalar_lea.vmem %s0, 2
    %v59 = vld [vmem:[%s58] ss:$4 sm:$0x3]
    %s60 = scalar_lea.vmem %s0, 3
    %v61 = vld [vmem:[%s60] ss:$4 sm:$0x3]
    %s62 = sld [smem:[#allocation2]]
    %v63 = vstv %s62
    %v64 = vmul.f32 %v63, %v55
    %s65 = sld [smem:[#allocation2 + $0x80]]
    %v66 = vstv %s65
    %v67 = vmul.f32 %v66, %v57
    %v68 = vadd.f32 %v64, %v67
    %s69 = sld [smem:[#allocation2 + $0x100]]
    %v70 = vstv %s69
    %v71 = vmul.f32 %v70, %v59
    %v72 = vadd.f32 %v68, %v71
    %s73 = sld [smem:[#allocation2 + $0x180]]
    %v74 = vstv %s73
    %v75 = vmul.f32 %v74, %v61
    %v76 = vadd.f32 %v72, %v75
    %v77 = vtanh.pop %v76
    %s78 = sld [smem:[#allocation2 + $0x1]]
    %v79 = vstv %s78
    %v80 = vmul.f32 %v79, %v55
    %s81 = sld [smem:[#allocation2 + $0x81]]
    %v82 = vstv %s81
    %v83 = vmul.f32 %v82, %v57
    %v84 = vadd.f32 %v80, %v83
    %s85 = sld [smem:[#allocation2 + $0x101]]
    %v86 = vstv %s85
    %v87 = vmul.f32 %v86, %v59
    %v88 = vadd.f32 %v84, %v87
    %s89 = sld [smem:[#allocation2 + $0x181]]
    %v90 = vstv %s89
    %v91 = vmul.f32 %v90, %v61
    %v92 = vadd.f32 %v88, %v91
    %v93 = vtanh.pop %v92
    %s94 = sld [smem:[#allocation2 + $0x2]]
    %v95 = vstv %s94
    %v96 = vmul.f32 %v95, %v55
    %s97 = sld [smem:[#allocation2 + $0x82]]
    %v98 = vstv %s97
    %v99 = vmul.f32 %v98, %v57
    %v100 = vadd.f32 %v96, %v99
    %s101 = sld [smem:[#allocation2 + $0x102]]
    %v102 = vstv %s101
    %v103 = vmul.f32 %v102, %v59
    %v104 = vadd.f32 %v100, %v103
    %s105 = sld [smem:[#allocation2 + $0x182]]
    %v106 = vstv %s105
    %v107 = vmul.f32 %v106, %v61
    %v108 = vadd.f32 %v104, %v107
    %v109 = vtanh.pop %v108
    %s110 = sld [smem:[#allocation2 + $0x3]]
    %v111 = vstv %s110
    %v112 = vmul.f32 %v111, %v55
    %s113 = sld [smem:[#allocation2 + $0x83]]
    %v114 = vstv %s113
    %v115 = vmul.f32 %v114, %v57
    %v116 = vadd.f32 %v112, %v115
    %s117 = sld [smem:[#allocation2 + $0x103]]
    %v118 = vstv %s117
    %v119 = vmul.f32 %v118, %v59
    %v120 = vadd.f32 %v116, %v119
    %s121 = sld [smem:[#allocation2 + $0x183]]
    %v122 = vstv %s121
    %v123 = vmul.f32 %v122, %v61
    %v124 = vadd.f32 %v120, %v123
    %v125 = vtanh.pop %v124
    %v126 = vmul.f32 %v63, %v77
    %v127 = vmul.f32 %v66, %v93
    %v128 = vadd.f32 %v126, %v127
    %v129 = vmul.f32 %v70, %v109
    %v130 = vadd.f32 %v128, %v129
    %v131 = vmul.f32 %v74, %v125
    %v132 = vadd.f32 %v130, %v131
    %v133 = vtanh.pop %v132
    %v134 = vmul.f32 %v79, %v77
    %v135 = vmul.f32 %v82, %v93
    %v136 = vadd.f32 %v134, %v135
    %v137 = vmul.f32 %v86, %v109
    %v138 = vadd.f32 %v136, %v137
    %v139 = vmul.f32 %v90, %v125
    %v140 = vadd.f32 %v138, %v139
    %v141 = vtanh.pop %v140
    %v142 = vmul.f32 %v95, %v77
    %v143 = vmul.f32 %v98, %v93
    %v144 = vadd.f32 %v142, %v143
    %v145 = vmul.f32 %v102, %v109
    %v146 = vadd.f32 %v144, %v145
    %v147 = vmul.f32 %v106, %v125
    %v148 = vadd.f32 %v146, %v147
    %v149 = vtanh.pop %v148
    %v150 = vmul.f32 %v111, %v77
    %v151 = vmul.f32 %v114, %v93
    %v152 = vadd.f32 %v150, %v151
    %v153 = vmul.f32 %v118, %v109
    %v154 = vadd.f32 %v152, %v153
    %v155 = vmul.f32 %v122, %v125
    %v156 = vadd.f32 %v154, %v155
    %v157 = vtanh.pop %v156
    %v158 = vand.u32 2147483647, %v133
    %vm159 = vcmp.le.f32.partialorder %v158, 0.7853982
    %vm160 = vcmp.lt.s32.totalorder %v133, 0
    %v161 = vand.u32 %v133, 2139095040
    %v162 = vshrl.u32 %v161, 23
    %v163 = vsub.s32 %v162, 127
    %v164 = vand.u32 2147483647, %v133
    %v165 = vand.u32 %v164, 8388607
    %v166 = vor.u32 %v165, 8388608
    %v167 = vsub.s32 0, %v166
    %v168 = vadd.s32 %v163, 1
    %vm169 = vcmp.gt.s32.totalorder %v168, 0
    %v170 = vsel %vm169, %v168, 0
    %v171 = vshrl.u32 %v170, 5
    %v172 = vand.u32 %v170, 31
    %v173 = vsub.s32 32, %v172
    %v174 = vshrl.u32 683565275, %v173
    %v175 = vshll.u32 683565275, %v172
    %v176 = vshrl.u32 2475754826, %v173
    %v177 = vor.u32 %v175, %v176
    %v178 = vshll.u32 2475754826, %v172
    %v179 = vshrl.u32 2131351028, %v173
    %v180 = vor.u32 %v178, %v179
    %v181 = vshll.u32 2131351028, %v172
    %v182 = vshrl.u32 2102212464, %v173
    %v183 = vor.u32 %v181, %v182
    %v184 = vshll.u32 2102212464, %v172
    %v185 = vshrl.u32 920167782, %v173
    %v186 = vor.u32 %v184, %v185
    %v187 = vshll.u32 920167782, %v172
    %v188 = vshrl.u32 1326507024, %v173
    %v189 = vor.u32 %v187, %v188
    %vm190 = vcmp.lt.s32.totalorder %v171, 1
    %vm191 = vcmp.lt.s32.totalorder %v171, 2
    %vm192 = vcmp.lt.s32.totalorder %v171, 3
    %vm193 = vcmp.lt.s32.totalorder %v171, 4
    %v194 = vsel %vm190, %v174, %v177
    %v195 = vsel %vm193, %v183, 2102212464
    %v196 = vsel %vm192, %v180, %v195
    %v197 = vsel %vm191, %v194, %v196
    %v198 = vsel %vm190, %v177, %v180
    %v199 = vsel %vm193, %v186, 920167782
    %v200 = vsel %vm192, %v183, %v199
    %v201 = vsel %vm191, %v198, %v200
    %v202 = vsel %vm190, %v180, %v183
    %v203 = vsel %vm193, %v189, 1326507024
    %v204 = vsel %vm192, %v186, %v203
    %v205 = vsel %vm191, %v202, %v204
    %v206 = vshll.u32 %v166, 8
    %v207 = vmul.u32.u64.compose %v206, %v205
    %v208 = vextract.low.u32 %v207
    %v209 = vextract.high.u32 %v207
    %v210 = vmul.u32.u64.compose %v206, %v201
    %v211 = vextract.low.u32 %v210
    %v212 = vextract.high.u32 %v210
    %v213 = vmul.u32 %v206, %v197
    %v214 = vadd.s32 %v209, %v211
    %vm215 = vc.u32 %v209, %v211
    %v216 = vadd.s32 %v212, 1
    %v217 = vsel %vm215, %v216, %v212
    %v218 = vadd.s32 %v213, %v217
    %v219 = vadd.s32 %v218, 536870912
    %v220 = vshrl.u32 %v219, 30
    %v221 = vshll.u32 %v220, 30
    %v222 = vsub.s32 %v218, %v221
    %vm223 = vcmp.lt.s32.totalorder %v222, 0
    %v224 = vsub.s32 0, %v222
    %v225 = vsel %vm223, %v224, %v222
    %v226 = vclz %v225
    %v227 = vsub.s32 %v226, 2
    %vm228 = vcmp.gt.s32.totalorder 0, %v227
    %v229 = vsel %vm228, 0, %v227
    %v230 = vsub.s32 32, %v229
    %v231 = vshll.u32 %v222, %v229
    %v232 = vshrl.u32 %v214, %v230
    %v233 = vor.u32 %v231, %v232
    %v234 = vsub.s32 4294967266, %v229
    %v235 = vadd.s32 %v234, 127
    %v236 = vshll.u32 %v235, 23
    %v237 = vor.u32 4788187, %v236
    %v238 = vand.u32 2147483647, %v237
    %v240 = vcvt.s32.f32 %v233
    %v241 = vmul.f32 %v240, %v238
    %v242 = vxor.u32 %v241, 2147483648
    %v243 = vsel %vm160, %v242, %v241
    %v244 = vsub.s32 4, %v220
    %v245 = vsel %vm160, %v244, %v220
    %v246 = vsel %vm159, %v133, %v243
    %v247 = vsel %vm159, 0, %v245
    %v248 = vcosq.f32.pop %v246
    %v249 = vsinq.f32.pop %v246
    %vm250 = vweird.f32 %v133
    %v251 = vand.u32 %v247, 3
    %vm252 = vcmp.lt.s32.totalorder %v251, 2
    %vm253 = vcmp.eq.s32.totalorder %v251, 0
    %v254 = vxor.u32 %v249, 2147483648
    %v255 = vsel %vm253, %v248, %v254
    %vm256 = vcmp.eq.s32.totalorder %v251, 2
    %v257 = vxor.u32 %v248, 2147483648
    %v258 = vsel %vm256, %v257, %v249
    %v259 = vsel %vm252, %v255, %v258
    %v260 = vsel %vm250, nan, %v259
    %v261 = vand.u32 2147483647, %v141
    %vm262 = vcmp.le.f32.partialorder %v261, 0.7853982
    %vm263 = vcmp.lt.s32.totalorder %v141, 0
    %v264 = vand.u32 %v141, 2139095040
    %v265 = vshrl.u32 %v264, 23
    %v266 = vsub.s32 %v265, 127
    %v267 = vand.u32 2147483647, %v141
    %v268 = vand.u32 %v267, 8388607
    %v269 = vor.u32 %v268, 8388608
    %v270 = vsub.s32 0, %v269
    %v271 = vadd.s32 %v266, 1
    %vm272 = vcmp.gt.s32.totalorder %v271, 0
    %v273 = vsel %vm272, %v271, 0
    %v274 = vshrl.u32 %v273, 5
    %v275 = vand.u32 %v273, 31
    %v276 = vsub.s32 32, %v275
    %v277 = vshrl.u32 683565275, %v276
    %v278 = vshll.u32 683565275, %v275
    %v279 = vshrl.u32 2475754826, %v276
    %v280 = vor.u32 %v278, %v279
    %v281 = vshll.u32 2475754826, %v275
    %v282 = vshrl.u32 2131351028, %v276
    %v283 = vor.u32 %v281, %v282
    %v284 = vshll.u32 2131351028, %v275
    %v285 = vshrl.u32 2102212464, %v276
    %v286 = vor.u32 %v284, %v285
    %v287 = vshll.u32 2102212464, %v275
    %v288 = vshrl.u32 920167782, %v276
    %v289 = vor.u32 %v287, %v288
    %v290 = vshll.u32 920167782, %v275
    %v291 = vshrl.u32 1326507024, %v276
    %v292 = vor.u32 %v290, %v291
    %vm293 = vcmp.lt.s32.totalorder %v274, 1
    %vm294 = vcmp.lt.s32.totalorder %v274, 2
    %vm295 = vcmp.lt.s32.totalorder %v274, 3
    %vm296 = vcmp.lt.s32.totalorder %v274, 4
    %v297 = vsel %vm293, %v277, %v280
    %v298 = vsel %vm296, %v286, 2102212464
    %v299 = vsel %vm295, %v283, %v298
    %v300 = vsel %vm294, %v297, %v299
    %v301 = vsel %vm293, %v280, %v283
    %v302 = vsel %vm296, %v289, 920167782
    %v303 = vsel %vm295, %v286, %v302
    %v304 = vsel %vm294, %v301, %v303
    %v305 = vsel %vm293, %v283, %v286
    %v306 = vsel %vm296, %v292, 1326507024
    %v307 = vsel %vm295, %v289, %v306
    %v308 = vsel %vm294, %v305, %v307
    %v309 = vshll.u32 %v269, 8
    %v310 = vmul.u32.u64.compose %v309, %v308
    %v311 = vextract.low.u32 %v310
    %v312 = vextract.high.u32 %v310
    %v313 = vmul.u32.u64.compose %v309, %v304
    %v314 = vextract.low.u32 %v313
    %v315 = vextract.high.u32 %v313
    %v316 = vmul.u32 %v309, %v300
    %v317 = vadd.s32 %v312, %v314
    %vm318 = vc.u32 %v312, %v314
    %v319 = vadd.s32 %v315, 1
    %v320 = vsel %vm318, %v319, %v315
    %v321 = vadd.s32 %v316, %v320
    %v322 = vadd.s32 %v321, 536870912
    %v323 = vshrl.u32 %v322, 30
    %v324 = vshll.u32 %v323, 30
    %v325 = vsub.s32 %v321, %v324
    %vm326 = vcmp.lt.s32.totalorder %v325, 0
    %v327 = vsub.s32 0, %v325
    %v328 = vsel %vm326, %v327, %v325
    %v329 = vclz %v328
    %v330 = vsub.s32 %v329, 2
    %vm331 = vcmp.gt.s32.totalorder 0, %v330
    %v332 = vsel %vm331, 0, %v330
    %v333 = vsub.s32 32, %v332
    %v334 = vshll.u32 %v325, %v332
    %v335 = vshrl.u32 %v317, %v333
    %v336 = vor.u32 %v334, %v335
    %v337 = vsub.s32 4294967266, %v332
    %v338 = vadd.s32 %v337, 127
    %v339 = vshll.u32 %v338, 23
    %v340 = vor.u32 4788187, %v339
    %v341 = vand.u32 2147483647, %v340
    %v343 = vcvt.s32.f32 %v336
    %v344 = vmul.f32 %v343, %v341
    %v345 = vxor.u32 %v344, 2147483648
    %v346 = vsel %vm263, %v345, %v344
    %v347 = vsub.s32 4, %v323
    %v348 = vsel %vm263, %v347, %v323
    %v349 = vsel %vm262, %v141, %v346
    %v350 = vsel %vm262, 0, %v348
    %v351 = vcosq.f32.pop %v349
    %v352 = vsinq.f32.pop %v349
    %vm353 = vweird.f32 %v141
    %v354 = vand.u32 %v350, 3
    %vm355 = vcmp.lt.s32.totalorder %v354, 2
    %vm356 = vcmp.eq.s32.totalorder %v354, 0
    %v357 = vxor.u32 %v352, 2147483648
    %v358 = vsel %vm356, %v351, %v357
    %vm359 = vcmp.eq.s32.totalorder %v354, 2
    %v360 = vxor.u32 %v351, 2147483648
    %v361 = vsel %vm359, %v360, %v352
    %v362 = vsel %vm355, %v358, %v361
    %v363 = vsel %vm353, nan, %v362
    %v364 = vand.u32 2147483647, %v149
    %vm365 = vcmp.le.f32.partialorder %v364, 0.7853982
    %vm366 = vcmp.lt.s32.totalorder %v149, 0
    %v367 = vand.u32 %v149, 2139095040
    %v368 = vshrl.u32 %v367, 23
    %v369 = vsub.s32 %v368, 127
    %v370 = vand.u32 2147483647, %v149
    %v371 = vand.u32 %v370, 8388607
    %v372 = vor.u32 %v371, 8388608
    %v373 = vsub.s32 0, %v372
    %v374 = vadd.s32 %v369, 1
    %vm375 = vcmp.gt.s32.totalorder %v374, 0
    %v376 = vsel %vm375, %v374, 0
    %v377 = vshrl.u32 %v376, 5
    %v378 = vand.u32 %v376, 31
    %v379 = vsub.s32 32, %v378
    %v380 = vshrl.u32 683565275, %v379
    %v381 = vshll.u32 683565275, %v378
    %v382 = vshrl.u32 2475754826, %v379
    %v383 = vor.u32 %v381, %v382
    %v384 = vshll.u32 2475754826, %v378
    %v385 = vshrl.u32 2131351028, %v379
    %v386 = vor.u32 %v384, %v385
    %v387 = vshll.u32 2131351028, %v378
    %v388 = vshrl.u32 2102212464, %v379
    %v389 = vor.u32 %v387, %v388
    %v390 = vshll.u32 2102212464, %v378
    %v391 = vshrl.u32 920167782, %v379
    %v392 = vor.u32 %v390, %v391
    %v393 = vshll.u32 920167782, %v378
    %v394 = vshrl.u32 1326507024, %v379
    %v395 = vor.u32 %v393, %v394
    %vm396 = vcmp.lt.s32.totalorder %v377, 1
    %vm397 = vcmp.lt.s32.totalorder %v377, 2
    %vm398 = vcmp.lt.s32.totalorder %v377, 3
    %vm399 = vcmp.lt.s32.totalorder %v377, 4
    %v400 = vsel %vm396, %v380, %v383
    %v401 = vsel %vm399, %v389, 2102212464
    %v402 = vsel %vm398, %v386, %v401
    %v403 = vsel %vm397, %v400, %v402
    %v404 = vsel %vm396, %v383, %v386
    %v405 = vsel %vm399, %v392, 920167782
    %v406 = vsel %vm398, %v389, %v405
    %v407 = vsel %vm397, %v404, %v406
    %v408 = vsel %vm396, %v386, %v389
    %v409 = vsel %vm399, %v395, 1326507024
    %v410 = vsel %vm398, %v392, %v409
    %v411 = vsel %vm397, %v408, %v410
    %v412 = vshll.u32 %v372, 8
    %v413 = vmul.u32.u64.compose %v412, %v411
    %v414 = vextract.low.u32 %v413
    %v415 = vextract.high.u32 %v413
    %v416 = vmul.u32.u64.compose %v412, %v407
    %v417 = vextract.low.u32 %v416
    %v418 = vextract.high.u32 %v416
    %v419 = vmul.u32 %v412, %v403
    %v420 = vadd.s32 %v415, %v417
    %vm421 = vc.u32 %v415, %v417
    %v422 = vadd.s32 %v418, 1
    %v423 = vsel %vm421, %v422, %v418
    %v424 = vadd.s32 %v419, %v423
    %v425 = vadd.s32 %v424, 536870912
    %v426 = vshrl.u32 %v425, 30
    %v427 = vshll.u32 %v426, 30
    %v428 = vsub.s32 %v424, %v427
    %vm429 = vcmp.lt.s32.totalorder %v428, 0
    %v430 = vsub.s32 0, %v428
    %v431 = vsel %vm429, %v430, %v428
    %v432 = vclz %v431
    %v433 = vsub.s32 %v432, 2
    %vm434 = vcmp.gt.s32.totalorder 0, %v433
    %v435 = vsel %vm434, 0, %v433
    %v436 = vsub.s32 32, %v435
    %v437 = vshll.u32 %v428, %v435
    %v438 = vshrl.u32 %v420, %v436
    %v439 = vor.u32 %v437, %v438
    %v440 = vsub.s32 4294967266, %v435
    %v441 = vadd.s32 %v440, 127
    %v442 = vshll.u32 %v441, 23
    %v443 = vor.u32 4788187, %v442
    %v444 = vand.u32 2147483647, %v443
    %v446 = vcvt.s32.f32 %v439
    %v447 = vmul.f32 %v446, %v444
    %v448 = vxor.u32 %v447, 2147483648
    %v449 = vsel %vm366, %v448, %v447
    %v450 = vsub.s32 4, %v426
    %v451 = vsel %vm366, %v450, %v426
    %v452 = vsel %vm365, %v149, %v449
    %v453 = vsel %vm365, 0, %v451
    %v454 = vcosq.f32.pop %v452
    %v455 = vsinq.f32.pop %v452
    %vm456 = vweird.f32 %v149
    %v457 = vand.u32 %v453, 3
    %vm458 = vcmp.lt.s32.totalorder %v457, 2
    %vm459 = vcmp.eq.s32.totalorder %v457, 0
    %v460 = vxor.u32 %v455, 2147483648
    %v461 = vsel %vm459, %v454, %v460
    %vm462 = vcmp.eq.s32.totalorder %v457, 2
    %v463 = vxor.u32 %v454, 2147483648
    %v464 = vsel %vm462, %v463, %v455
    %v465 = vsel %vm458, %v461, %v464
    %v466 = vsel %vm456, nan, %v465
    %v467 = vand.u32 2147483647, %v157
    %vm468 = vcmp.le.f32.partialorder %v467, 0.7853982
    %vm469 = vcmp.lt.s32.totalorder %v157, 0
    %v470 = vand.u32 %v157, 2139095040
    %v471 = vshrl.u32 %v470, 23
    %v472 = vsub.s32 %v471, 127
    %v473 = vand.u32 2147483647, %v157
    %v474 = vand.u32 %v473, 8388607
    %v475 = vor.u32 %v474, 8388608
    %v476 = vsub.s32 0, %v475
    %v477 = vadd.s32 %v472, 1
    %vm478 = vcmp.gt.s32.totalorder %v477, 0
    %v479 = vsel %vm478, %v477, 0
    %v480 = vshrl.u32 %v479, 5
    %v481 = vand.u32 %v479, 31
    %v482 = vsub.s32 32, %v481
    %v483 = vshrl.u32 683565275, %v482
    %v484 = vshll.u32 683565275, %v481
    %v485 = vshrl.u32 2475754826, %v482
    %v486 = vor.u32 %v484, %v485
    %v487 = vshll.u32 2475754826, %v481
    %v488 = vshrl.u32 2131351028, %v482
    %v489 = vor.u32 %v487, %v488
    %v490 = vshll.u32 2131351028, %v481
    %v491 = vshrl.u32 2102212464, %v482
    %v492 = vor.u32 %v490, %v491
    %v493 = vshll.u32 2102212464, %v481
    %v494 = vshrl.u32 920167782, %v482
    %v495 = vor.u32 %v493, %v494
    %v496 = vshll.u32 920167782, %v481
    %v497 = vshrl.u32 1326507024, %v482
    %v498 = vor.u32 %v496, %v497
    %vm499 = vcmp.lt.s32.totalorder %v480, 1
    %vm500 = vcmp.lt.s32.totalorder %v480, 2
    %vm501 = vcmp.lt.s32.totalorder %v480, 3
    %vm502 = vcmp.lt.s32.totalorder %v480, 4
    %v503 = vsel %vm499, %v483, %v486
    %v504 = vsel %vm502, %v492, 2102212464
    %v505 = vsel %vm501, %v489, %v504
    %v506 = vsel %vm500, %v503, %v505
    %v507 = vsel %vm499, %v486, %v489
    %v508 = vsel %vm502, %v495, 920167782
    %v509 = vsel %vm501, %v492, %v508
    %v510 = vsel %vm500, %v507, %v509
    %v511 = vsel %vm499, %v489, %v492
    %v512 = vsel %vm502, %v498, 1326507024
    %v513 = vsel %vm501, %v495, %v512
    %v514 = vsel %vm500, %v511, %v513
    %v515 = vshll.u32 %v475, 8
    %v516 = vmul.u32.u64.compose %v515, %v514
    %v517 = vextract.low.u32 %v516
    %v518 = vextract.high.u32 %v516
    %v519 = vmul.u32.u64.compose %v515, %v510
    %v520 = vextract.low.u32 %v519
    %v521 = vextract.high.u32 %v519
    %v522 = vmul.u32 %v515, %v506
    %v523 = vadd.s32 %v518, %v520
    %vm524 = vc.u32 %v518, %v520
    %v525 = vadd.s32 %v521, 1
    %v526 = vsel %vm524, %v525, %v521
    %v527 = vadd.s32 %v522, %v526
    %v528 = vadd.s32 %v527, 536870912
    %v529 = vshrl.u32 %v528, 30
    %v530 = vshll.u32 %v529, 30
    %v531 = vsub.s32 %v527, %v530
    %vm532 = vcmp.lt.s32.totalorder %v531, 0
    %v533 = vsub.s32 0, %v531
    %v534 = vsel %vm532, %v533, %v531
    %v535 = vclz %v534
    %v536 = vsub.s32 %v535, 2
    %vm537 = vcmp.gt.s32.totalorder 0, %v536
    %v538 = vsel %vm537, 0, %v536
    %v539 = vsub.s32 32, %v538
    %v540 = vshll.u32 %v531, %v538
    %v541 = vshrl.u32 %v523, %v539
    %v542 = vor.u32 %v540, %v541
    %v543 = vsub.s32 4294967266, %v538
    %v544 = vadd.s32 %v543, 127
    %v545 = vshll.u32 %v544, 23
    %v546 = vor.u32 4788187, %v545
    %v547 = vand.u32 2147483647, %v546
    %v549 = vcvt.s32.f32 %v542
    %v550 = vmul.f32 %v549, %v547
    %v551 = vxor.u32 %v550, 2147483648
    %v552 = vsel %vm469, %v551, %v550
    %v553 = vsub.s32 4, %v529
    %v554 = vsel %vm469, %v553, %v529
    %v555 = vsel %vm468, %v157, %v552
    %v556 = vsel %vm468, 0, %v554
    %v557 = vcosq.f32.pop %v555
    %v558 = vsinq.f32.pop %v555
    %vm559 = vweird.f32 %v157
    %v560 = vand.u32 %v556, 3
    %vm561 = vcmp.lt.s32.totalorder %v560, 2
    %vm562 = vcmp.eq.s32.totalorder %v560, 0
    %v563 = vxor.u32 %v558, 2147483648
    %v564 = vsel %vm562, %v557, %v563
    %vm565 = vcmp.eq.s32.totalorder %v560, 2
    %v566 = vxor.u32 %v557, 2147483648
    %v567 = vsel %vm565, %v566, %v558
    %v568 = vsel %vm561, %v564, %v567
    %v569 = vsel %vm559, nan, %v568
    %s570 = sld [smem:[#allocation6]]
    %s571 = sld [smem:[#allocation4]]
    %v572 = vstv %s571
    %v573 = vmul.f32 %v572, %v260
    %v574 = vstv %s570
    %v575 = vadd.f32 %v574, %v573
    %s576 = sld [smem:[#allocation4 + $0x1]]
    %v577 = vstv %s576
    %v578 = vmul.f32 %v577, %v363
    %v579 = vadd.f32 %v575, %v578
    %s580 = sld [smem:[#allocation4 + $0x2]]
    %v581 = vstv %s580
    %v582 = vmul.f32 %v581, %v466
    %v583 = vadd.f32 %v579, %v582
    %s584 = sld [smem:[#allocation4 + $0x3]]
    %v585 = vstv %s584
    %v586 = vmul.f32 %v585, %v569
    %v587 = vadd.f32 %v583, %v586
    %s588 = sld [smem:[#allocation6 + $0x1]]
    %s589 = sld [smem:[#allocation4 + $0x80]]
    %v590 = vstv %s589
    %v591 = vmul.f32 %v590, %v260
    %v592 = vstv %s588
    %v593 = vadd.f32 %v592, %v591
    %s594 = sld [smem:[#allocation4 + $0x81]]
    %v595 = vstv %s594
    %v596 = vmul.f32 %v595, %v363
    %v597 = vadd.f32 %v593, %v596
    %s598 = sld [smem:[#allocation4 + $0x82]]
    %v599 = vstv %s598
    %v600 = vmul.f32 %v599, %v466
    %v601 = vadd.f32 %v597, %v600
    %s602 = sld [smem:[#allocation4 + $0x83]]
    %v603 = vstv %s602
    %v604 = vmul.f32 %v603, %v569
    %v605 = vadd.f32 %v601, %v604
    %s606 = sld [smem:[#allocation6 + $0x2]]
    %s607 = sld [smem:[#allocation4 + $0x100]]
    %v608 = vstv %s607
    %v609 = vmul.f32 %v608, %v260
    %v610 = vstv %s606
    %v611 = vadd.f32 %v610, %v609
    %s612 = sld [smem:[#allocation4 + $0x101]]
    %v613 = vstv %s612
    %v614 = vmul.f32 %v613, %v363
    %v615 = vadd.f32 %v611, %v614
    %s616 = sld [smem:[#allocation4 + $0x102]]
    %v617 = vstv %s616
    %v618 = vmul.f32 %v617, %v466
    %v619 = vadd.f32 %v615, %v618
    %s620 = sld [smem:[#allocation4 + $0x103]]
    %v621 = vstv %s620
    %v622 = vmul.f32 %v621, %v569
    %v623 = vadd.f32 %v619, %v622
    %s624 = sld [smem:[#allocation6 + $0x3]]
    %s625 = sld [smem:[#allocation4 + $0x180]]
    %v626 = vstv %s625
    %v627 = vmul.f32 %v626, %v260
    %v628 = vstv %s624
    %v629 = vadd.f32 %v628, %v627
    %s630 = sld [smem:[#allocation4 + $0x181]]
    %v631 = vstv %s630
    %v632 = vmul.f32 %v631, %v363
    %v633 = vadd.f32 %v629, %v632
    %s634 = sld [smem:[#allocation4 + $0x182]]
    %v635 = vstv %s634
    %v636 = vmul.f32 %v635, %v466
    %v637 = vadd.f32 %v633, %v636
    %s638 = sld [smem:[#allocation4 + $0x183]]
    %v639 = vstv %s638
    %v640 = vmul.f32 %v639, %v569
    %v641 = vadd.f32 %v637, %v640
    %s642 = sld [smem:[#allocation6 + $0x4]]
    %s643 = sld [smem:[#allocation4 + $0x200]]
    %v644 = vstv %s643
    %v645 = vmul.f32 %v644, %v260
    %v646 = vstv %s642
    %v647 = vadd.f32 %v646, %v645
    %s648 = sld [smem:[#allocation4 + $0x201]]
    %v649 = vstv %s648
    %v650 = vmul.f32 %v649, %v363
    %v651 = vadd.f32 %v647, %v650
    %s652 = sld [smem:[#allocation4 + $0x202]]
    %v653 = vstv %s652
    %v654 = vmul.f32 %v653, %v466
    %v655 = vadd.f32 %v651, %v654
    %s656 = sld [smem:[#allocation4 + $0x203]]
    %v657 = vstv %s656
    %v658 = vmul.f32 %v657, %v569
    %v659 = vadd.f32 %v655, %v658
    %s660 = sld [smem:[#allocation6 + $0x5]]
    %s661 = sld [smem:[#allocation4 + $0x280]]
    %v662 = vstv %s661
    %v663 = vmul.f32 %v662, %v260
    %v664 = vstv %s660
    %v665 = vadd.f32 %v664, %v663
    %s666 = sld [smem:[#allocation4 + $0x281]]
    %v667 = vstv %s666
    %v668 = vmul.f32 %v667, %v363
    %v669 = vadd.f32 %v665, %v668
    %s670 = sld [smem:[#allocation4 + $0x282]]
    %v671 = vstv %s670
    %v672 = vmul.f32 %v671, %v466
    %v673 = vadd.f32 %v669, %v672
    %s674 = sld [smem:[#allocation4 + $0x283]]
    %v675 = vstv %s674
    %v676 = vmul.f32 %v675, %v569
    %v677 = vadd.f32 %v673, %v676
    %s678 = sld [smem:[#allocation6 + $0x6]]
    %s679 = sld [smem:[#allocation4 + $0x300]]
    %v680 = vstv %s679
    %v681 = vmul.f32 %v680, %v260
    %v682 = vstv %s678
    %v683 = vadd.f32 %v682, %v681
    %s684 = sld [smem:[#allocation4 + $0x301]]
    %v685 = vstv %s684
    %v686 = vmul.f32 %v685, %v363
    %v687 = vadd.f32 %v683, %v686
    %s688 = sld [smem:[#allocation4 + $0x302]]
    %v689 = vstv %s688
    %v690 = vmul.f32 %v689, %v466
    %v691 = vadd.f32 %v687, %v690
    %s692 = sld [smem:[#allocation4 + $0x303]]
    %v693 = vstv %s692
    %v694 = vmul.f32 %v693, %v569
    %v695 = vadd.f32 %v691, %v694
    %s696 = sld [smem:[#allocation6 + $0x7]]
    %s697 = sld [smem:[#allocation4 + $0x380]]
    %v698 = vstv %s697
    %v699 = vmul.f32 %v698, %v260
    %v700 = vstv %s696
    %v701 = vadd.f32 %v700, %v699
    %s702 = sld [smem:[#allocation4 + $0x381]]
    %v703 = vstv %s702
    %v704 = vmul.f32 %v703, %v363
    %v705 = vadd.f32 %v701, %v704
    %s706 = sld [smem:[#allocation4 + $0x382]]
    %v707 = vstv %s706
    %v708 = vmul.f32 %v707, %v466
    %v709 = vadd.f32 %v705, %v708
    %s710 = sld [smem:[#allocation4 + $0x383]]
    %v711 = vstv %s710
    %v712 = vmul.f32 %v711, %v569
    %v713 = vadd.f32 %v709, %v712
    %s714 = sld [smem:[#allocation6 + $0x8]]
    %s715 = sld [smem:[#allocation4 + $0x400]]
    %v716 = vstv %s715
    %v717 = vmul.f32 %v716, %v260
    %v718 = vstv %s714
    %v719 = vadd.f32 %v718, %v717
    %s720 = sld [smem:[#allocation4 + $0x401]]
    %v721 = vstv %s720
    %v722 = vmul.f32 %v721, %v363
    %v723 = vadd.f32 %v719, %v722
    %s724 = sld [smem:[#allocation4 + $0x402]]
    %v725 = vstv %s724
    %v726 = vmul.f32 %v725, %v466
    %v727 = vadd.f32 %v723, %v726
    %s728 = sld [smem:[#allocation4 + $0x403]]
    %v729 = vstv %s728
    %v730 = vmul.f32 %v729, %v569
    %v731 = vadd.f32 %v727, %v730
    %s732 = sld [smem:[#allocation6 + $0x9]]
    %s733 = sld [smem:[#allocation4 + $0x480]]
    %v734 = vstv %s733
    %v735 = vmul.f32 %v734, %v260
    %v736 = vstv %s732
    %v737 = vadd.f32 %v736, %v735
    %s738 = sld [smem:[#allocation4 + $0x481]]
    %v739 = vstv %s738
    %v740 = vmul.f32 %v739, %v363
    %v741 = vadd.f32 %v737, %v740
    %s742 = sld [smem:[#allocation4 + $0x482]]
    %v743 = vstv %s742
    %v744 = vmul.f32 %v743, %v466
    %v745 = vadd.f32 %v741, %v744
    %s746 = sld [smem:[#allocation4 + $0x483]]
    %v747 = vstv %s746
    %v748 = vmul.f32 %v747, %v569
    %v749 = vadd.f32 %v745, %v748
    %v751 = vlaneseq
    %v752 = vshrl.u32 %v751, 7
    %v753 = vsub.s32 0, %v752
    %v754 = vrot.slane %v587, %v753
    %v755 = vlaneseq
    %v756 = vshrl.u32 %v755, 7
    %v757 = vsub.s32 1, %v756
    %v758 = vrot.slane %v587, %v757
    %v762 = vlaneseq
    %v763 = vshrl.u32 %v762, 7
    %v764 = vsub.s32 0, %v763
    %v765 = vrot.slane %v605, %v764
    %v766 = vlaneseq
    %v767 = vshrl.u32 %v766, 7
    %v768 = vsub.s32 1, %v767
    %v769 = vrot.slane %v605, %v768
    %v773 = vlaneseq
    %v774 = vshrl.u32 %v773, 7
    %v775 = vsub.s32 0, %v774
    %v776 = vrot.slane %v623, %v775
    %v777 = vlaneseq
    %v778 = vshrl.u32 %v777, 7
    %v779 = vsub.s32 1, %v778
    %v780 = vrot.slane %v623, %v779
    %v784 = vlaneseq
    %v785 = vshrl.u32 %v784, 7
    %v786 = vsub.s32 0, %v785
    %v787 = vrot.slane %v641, %v786
    %v788 = vlaneseq
    %v789 = vshrl.u32 %v788, 7
    %v790 = vsub.s32 1, %v789
    %v791 = vrot.slane %v641, %v790
    %v795 = vlaneseq
    %v796 = vshrl.u32 %v795, 7
    %v797 = vsub.s32 0, %v796
    %v798 = vrot.slane %v659, %v797
    %v799 = vlaneseq
    %v800 = vshrl.u32 %v799, 7
    %v801 = vsub.s32 1, %v800
    %v802 = vrot.slane %v659, %v801
    %v806 = vlaneseq
    %v807 = vshrl.u32 %v806, 7
    %v808 = vsub.s32 0, %v807
    %v809 = vrot.slane %v677, %v808
    %v810 = vlaneseq
    %v811 = vshrl.u32 %v810, 7
    %v812 = vsub.s32 1, %v811
    %v813 = vrot.slane %v677, %v812
    %v817 = vlaneseq
    %v818 = vshrl.u32 %v817, 7
    %v819 = vsub.s32 0, %v818
    %v820 = vrot.slane %v695, %v819
    %v821 = vlaneseq
    %v822 = vshrl.u32 %v821, 7
    %v823 = vsub.s32 1, %v822
    %v824 = vrot.slane %v695, %v823
    %v828 = vlaneseq
    %v829 = vshrl.u32 %v828, 7
    %v830 = vsub.s32 0, %v829
    %v831 = vrot.slane %v713, %v830
    %v832 = vlaneseq
    %v833 = vshrl.u32 %v832, 7
    %v834 = vsub.s32 1, %v833
    %v835 = vrot.slane %v713, %v834
    %v839 = vlaneseq
    %v840 = vshrl.u32 %v839, 7
    %v841 = vsub.s32 0, %v840
    %v842 = vrot.slane %v731, %v841
    %v843 = vlaneseq
    %v844 = vshrl.u32 %v843, 7
    %v845 = vsub.s32 1, %v844
    %v846 = vrot.slane %v731, %v845
    %v850 = vlaneseq
    %v851 = vshrl.u32 %v850, 7
    %v852 = vsub.s32 0, %v851
    %v853 = vrot.slane %v749, %v852
    %v854 = vlaneseq
    %v855 = vshrl.u32 %v854, 7
    %v856 = vsub.s32 1, %v855
    %v857 = vrot.slane %v749, %v856
    %vm860 = vcmask 1040384
    %v861 = vsel %vm860, %v754, %v765
    %v862 = vsel %vm860, %v758, %v769
    %vm863 = vcmask 1041408
    %v864 = vsel %vm863, %v861, %v776
    %v865 = vsel %vm863, %v862, %v780
    %vm866 = vcmask 1042432
    %v867 = vsel %vm866, %v864, %v787
    %v868 = vsel %vm866, %v865, %v791
    %vm869 = vcmask 1043456
    %v870 = vsel %vm869, %v867, %v798
    %v871 = vsel %vm869, %v868, %v802
    %vm872 = vcmask 1044480
    %v873 = vsel %vm872, %v870, %v809
    %v874 = vsel %vm872, %v871, %v813
    %vm875 = vcmask 1045504
    %v876 = vsel %vm875, %v873, %v820
    %v877 = vsel %vm875, %v874, %v824
    %vm878 = vcmask 1046528
    %v879 = vsel %vm878, %v876, %v831
    %v880 = vsel %vm878, %v877, %v835
    %v881 = vsel %vm860, %v842, %v853
    %v882 = vsel %vm860, %v846, %v857
    %883 = vst [vmem:[%s4] sm:$0xff] %v879
    %884 = vst [vmem:[%s4 + $0x8] sm:$0xff] %v880
    %885 = vst [vmem:[%s4 + $0x10] sm:$0x3] %v881
    %886 = vst [vmem:[%s4 + $0x18] sm:$0x3] %v882
    // Predicated region
    $region30: #{quanv_forward.1} parent=1 // pred_check
      _
    $region31: #{quanv_forward.1} parent=1 // pred_check_branch
      %888 = sbr.rel (0) target = $region33
    $region32: #{quanv_forward.1} parent=1 // pred_region
      _
    $region33: #{quanv_forward.1} parent=1 // pred_fallthru
      _
    // Predicated region
    $region34: #{quanv_forward.1} parent=1 // pred_check
      _
    $region35: #{quanv_forward.1} parent=1 // pred_check_branch
      %890 = sbr.rel (0) target = $region37
    $region36: #{quanv_forward.1} parent=1 // pred_region
      _
    $region37: #{quanv_forward.1} parent=1 // pred_fallthru
      _
    %891 = vsyncpa [#allocation3], 1
    %892 = vsyncpa [#allocation5], 1

</llo_original>
